<compile_context>
chip_gen: v5e
topology: v5e:2x2
jax: 0.10.0
libtpu: 0.0.40
codegen_flags: <defaults>
</compile_context>

<pallas_src>
import functools
import math

import jax
import jax.numpy as jnp
from jax.experimental import pallas as pl
from jax.experimental.pallas import tpu as pltpu


# ----------------------------------------------------------------------------- kernel
def _autoencoder_kernel(norm, x_ref,
                        w1, b1, w2, b2, w3, b3,
                        w4, b4, w5, b5, w6, b6,
                        out_ref):
    """Fused forward: 6 Linear layers (+ReLU / optional sigmoid) on one batch tile."""
    h = x_ref[...]  # f32 activations

    def linear(h, w_ref, b_ref, relu):
        # bf16 MXU operands, f32 accumulation; bias + ReLU stay in f32
        # (v5e has no bf16 VALU; on v6e/v7x the VPU has slack anyway).
        y = jnp.dot(h.astype(jnp.bfloat16), w_ref[...],
                    preferred_element_type=jnp.float32) + b_ref[...]
        if relu:
            y = jnp.maximum(y, 0.0)
        return y

    # ---- encoder ----
    h = linear(h, w1, b1, relu=True)
    h = linear(h, w2, b2, relu=True)
    code = linear(h, w3, b3, relu=False)
    if norm:
        # sigmoid(0)=0.5 on padded code lanes is annihilated by W4's zero rows.
        code = jax.nn.sigmoid(code)
    # ---- decoder ----
    h = linear(code, w4, b4, relu=True)
    h = linear(h, w5, b5, relu=True)
    h = linear(h, w6, b6, relu=False)

    out_ref[...] = h.astype(out_ref.dtype)


# ----------------------------------------------------------------------------- params
def init_params(key, layer_dims):
    """Deterministic PyTorch-style init: U(-1/sqrt(fan_in), 1/sqrt(fan_in))."""
    params = []
    for din, dout in zip(layer_dims[:-1], layer_dims[1:]):
        key, kw, kb = jax.random.split(key, 3)
        bound = 1.0 / (din ** 0.5)
        w = jax.random.uniform(kw, (din, dout), jnp.float32, -bound, bound)
        b = jax.random.uniform(kb, (dout,), jnp.float32, -bound, bound)
        params.append((w, b))
    return params


def _round_up(n, m):
    return ((n + m - 1) // m) * m


def _choose_batch_tile(B, max_tile=1024, row_align=16):
    """Adaptive batch tile.

    - multiple of 16 rows (full packed bf16 sublane tiles for the MXU operands),
    - capped at `max_tile` (512-1024 rows is enough to sit near the HBM roofline
      while keeping the per-step fixed cost (~0.35us) negligible),
    - for non-tiny batches, aims for >=2 balanced grid steps so the "parallel"
      grid axis keeps both TensorCores busy on v7x,
    - tiny batches get a single minimally-padded tile (no 64x wasted work).
    """
    B = max(B, 1)
    if B <= 2 * row_align:
        return _round_up(B, row_align)
    return min(max_tile, _round_up(pl.cdiv(B, 2), row_align))


# ----------------------------------------------------------------------------- wrapper
def autoencoder_forward(x, params, norm=False, max_batch_tile=1024):
    """x: [B, *spatial] float32. Returns [B, *spatial] reconstruction."""
    assert len(params) == 6, "kernel is specialized for num_layers=3 (6 Linear layers)"
    B = x.shape[0]
    spatial = x.shape[1:]
    D = int(math.prod(spatial))
    xf = x.reshape(B, D)

    # ---- lane-dense feature padding: every layer width -> multiple of 128 ----
    dims = [p[0].shape[0] for p in params] + [params[-1][0].shape[1]]
    assert dims[0] == D and dims[-1] == D
    pdims = [max(128, _round_up(d, 128)) for d in dims]
    Dp = pdims[0]
    if Dp != D:
        xf = jnp.pad(xf, ((0, 0), (0, Dp - D)))

    # ---- adaptive batch tiling; pad (with zeros) only the ragged last tile ----
    batch_tile = _choose_batch_tile(B, max_tile=max_batch_tile)
    Bp = _round_up(max(B, 1), batch_tile)
    if Bp != B:
        # skipped entirely when batch_tile divides B (no extra HBM round-trip);
        # zero rows (not garbage) so nothing bad ever reaches HBM.
        xf = jnp.pad(xf, ((0, Bp - B), (0, 0)))

    weight_args = []
    weight_specs = []
    weight_bytes = 0
    flops = 0
    for li, (w, b) in enumerate(params):
        din_p, dout_p = pdims[li], pdims[li + 1]
        wp = jnp.pad(w, ((0, din_p - w.shape[0]),
                         (0, dout_p - w.shape[1]))).astype(jnp.bfloat16)
        bp = jnp.pad(b, (0, dout_p - b.shape[0])).astype(jnp.float32).reshape(1, dout_p)
        weight_args += [wp, bp]
        # grid-invariant blocks: constant index_map -> fetched once, reused per tile
        weight_specs += [pl.BlockSpec((din_p, dout_p), lambda i: (0, 0)),
                         pl.BlockSpec((1, dout_p), lambda i: (0, 0))]
        weight_bytes += wp.size * 2 + bp.size * 4
        flops += 2 * Bp * din_p * dout_p

    grid = (Bp // batch_tile,)

    # ---- explicit VMEM budget (safe on v7x: 64 MiB physical, 32 MiB default) ----
    io_block_bytes = 2 * 2 * batch_tile * Dp * 4          # double-buffered in + out f32 blocks
    act_bytes = 4 * batch_tile * max(pdims) * 4           # rough bound on f32 intermediates
    vmem_limit = min(64 * 1024 * 1024,
                     2 * (io_block_bytes + weight_bytes + act_bytes) + (4 << 20))

    cost = pl.CostEstimate(
        flops=flops,
        transcendentals=(Bp * pdims[len(pdims) // 2]) if norm else 0,
        bytes_accessed=Bp * Dp * 4 * 2 + weight_bytes,
    )

    out = pl.pallas_call(
        functools.partial(_autoencoder_kernel, norm),
        out_shape=jax.ShapeDtypeStruct((Bp, Dp), x.dtype),
        grid_spec=pltpu.PrefetchScalarGridSpec(
            num_scalar_prefetch=0,
            grid=grid,
            in_specs=[pl.BlockSpec((batch_tile, Dp), lambda i: (i, 0))] + weight_specs,
            out_specs=pl.BlockSpec((batch_tile, Dp), lambda i: (i, 0)),
        ),
        compiler_params=pltpu.CompilerParams(
            dimension_semantics=("parallel",),
            vmem_limit_bytes=int(vmem_limit),
        ),
        cost_estimate=cost,
    )(xf, *weight_args)

    return out[:B, :D].reshape(B, *spatial)


# ----------------------------------------------------------------------------- references
def reference_forward_f32(x, params, norm=False):
    """Plain f32 JAX reference mirroring the PyTorch module semantics."""
    B = x.shape[0]
    h = x.reshape(B, -1)
    (w1, b1), (w2, b2), (w3, b3), (w4, b4), (w5, b5), (w6, b6) = params
    h = jnp.maximum(h @ w1 + b1, 0.0)
    h = jnp.maximum(h @ w2 + b2, 0.0)
    code = h @ w3 + b3
    if norm:
        code = jax.nn.sigmoid(code)
    h = code @ w4 + b4
    h = jnp.maximum(h, 0.0) @ w5 + b5
    h = jnp.maximum(h, 0.0) @ w6 + b6
    return h.reshape(x.shape)


def reference_forward_mixed(x, params, norm=False):
    """bf16-operand / f32-accumulate reference matching the kernel's precision."""
    B = x.shape[0]
    h = x.reshape(B, -1)

    def lin(h, w, b, relu):
        y = jnp.dot(h.astype(jnp.bfloat16), w.astype(jnp.bfloat16),
                    preferred_element_type=jnp.float32) + b
        return jnp.maximum(y, 0.0) if relu else y

    (w1, b1), (w2, b2), (w3, b3), (w4, b4), (w5, b5), (w6, b6) = params
    h = lin(h, w1, b1, True)
    h = lin(h, w2, b2, True)
    code = lin(h, w3, b3, False)
    if norm:
        code = jax.nn.sigmoid(code)
    h = lin(code, w4, b4, True)
    h = lin(h, w5, b5, True)
    h = lin(h, w6, b6, False)
    return h.reshape(x.shape)


# ----------------------------------------------------------------------------- main
if __name__ == "__main__":
    # Small shapes consistent with the module's __init__:
    #   size=(16,16) -> input 256, layer_size=[128,64], bottleneck_dim=32, norm=False
    batch = 2
    size = (16, 16)
    layer_size = [128, 64]
    bottleneck_dim = 32
    norm = False

    input_size = size[0] * size[1]
    enc_dims = [input_size] + layer_size + [bottleneck_dim]         # 256,128,64,32
    dec_dims = [bottleneck_dim] + layer_size[::-1] + [input_size]   # 32,64,128,256
    layer_dims = enc_dims + dec_dims[1:]                            # 256,128,64,32,64,128,256

    key = jax.random.PRNGKey(0)
    kp, kx, kx2 = jax.random.split(key, 3)
    params = init_params(kp, layer_dims)

    # --- tiny-batch path (single 16-row tile, minimal padding) ---
    x = jax.random.normal(kx, (batch, *size), jnp.float32)
    y = autoencoder_forward(x, params, norm=norm)
    y = jax.block_until_ready(y)
    assert y.shape == x.shape

    # tight check vs. a reference with identical (bf16 x bf16 -> f32) precision
    y_mixed = reference_forward_mixed(x, params, norm=norm)
    assert jnp.allclose(y, y_mixed, atol=1e-3, rtol=1e-3), "mismatch vs mixed-precision reference"

    # loose sanity check vs. the full-f32 PyTorch-equivalent reference
    y_f32 = reference_forward_f32(x, params, norm=norm)
    assert jnp.allclose(y, y_f32, atol=5e-2, rtol=5e-2), "mismatch vs f32 reference"

    # --- larger-batch path (>=2 grid steps, ragged last tile zero-padded) ---
    xb = jax.random.normal(kx2, (300, *size), jnp.float32)
    yb = jax.block_until_ready(autoencoder_forward(xb, params, norm=norm))
    assert yb.shape == xb.shape
    yb_mixed = reference_forward_mixed(xb, params, norm=norm)
    assert jnp.allclose(yb, yb_mixed, atol=1e-3, rtol=1e-3), "mismatch on multi-tile batch"

    print("KERNEL_OK")
</pallas_src>

<mosaic_0001>
module attributes {stable_mosaic.version = 11 : i64} {
  func.func @_autoencoder_kernel(%arg0: i32, %arg1: memref<16x256xf32, #tpu.memory_space<vmem>>, %arg2: memref<256x128xbf16, #tpu.memory_space<vmem>>, %arg3: memref<1x128xf32, #tpu.memory_space<vmem>>, %arg4: memref<128x128xbf16, #tpu.memory_space<vmem>>, %arg5: memref<1x128xf32, #tpu.memory_space<vmem>>, %arg6: memref<128x128xbf16, #tpu.memory_space<vmem>>, %arg7: memref<1x128xf32, #tpu.memory_space<vmem>>, %arg8: memref<128x128xbf16, #tpu.memory_space<vmem>>, %arg9: memref<1x128xf32, #tpu.memory_space<vmem>>, %arg10: memref<128x128xbf16, #tpu.memory_space<vmem>>, %arg11: memref<1x128xf32, #tpu.memory_space<vmem>>, %arg12: memref<128x256xbf16, #tpu.memory_space<vmem>>, %arg13: memref<1x256xf32, #tpu.memory_space<vmem>>, %arg14: memref<16x256xf32, #tpu.memory_space<vmem>>) attributes {dimension_semantics = [#tpu.dimension_semantics<parallel>], iteration_bounds = array<i64: 1>, scalar_prefetch = 0 : i64, scratch_operands = 0 : i64, tpu.core_type = #tpu.core_type<tc>, window_params = [{transform_indices = @transform_0, window_bounds = array<i64: 16, 256>}, {pipeline_mode = #tpu.pipeline_mode<synchronous>, transform_indices = @transform_1, window_bounds = array<i64: 256, 128>}, {pipeline_mode = #tpu.pipeline_mode<synchronous>, transform_indices = @transform_2, window_bounds = array<i64: 1, 128>}, {pipeline_mode = #tpu.pipeline_mode<synchronous>, transform_indices = @transform_3, window_bounds = array<i64: 128, 128>}, {pipeline_mode = #tpu.pipeline_mode<synchronous>, transform_indices = @transform_4, window_bounds = array<i64: 1, 128>}, {pipeline_mode = #tpu.pipeline_mode<synchronous>, transform_indices = @transform_5, window_bounds = array<i64: 128, 128>}, {pipeline_mode = #tpu.pipeline_mode<synchronous>, transform_indices = @transform_6, window_bounds = array<i64: 1, 128>}, {pipeline_mode = #tpu.pipeline_mode<synchronous>, transform_indices = @transform_7, window_bounds = array<i64: 128, 128>}, {pipeline_mode = #tpu.pipeline_mode<synchronous>, transform_indices = @transform_8, window_bounds = array<i64: 1, 128>}, {pipeline_mode = #tpu.pipeline_mode<synchronous>, transform_indices = @transform_9, window_bounds = array<i64: 128, 128>}, {pipeline_mode = #tpu.pipeline_mode<synchronous>, transform_indices = @transform_10, window_bounds = array<i64: 1, 128>}, {pipeline_mode = #tpu.pipeline_mode<synchronous>, transform_indices = @transform_11, window_bounds = array<i64: 128, 256>}, {pipeline_mode = #tpu.pipeline_mode<synchronous>, transform_indices = @transform_12, window_bounds = array<i64: 1, 256>}, {transform_indices = @transform_13, window_bounds = array<i64: 16, 256>}]} {
    %c0 = arith.constant 0 : index
    %c0_0 = arith.constant 0 : index
    %0 = vector.load %arg1[%c0, %c0_0] : memref<16x256xf32, #tpu.memory_space<vmem>>, vector<16x256xf32>
    %1 = arith.truncf %0 : vector<16x256xf32> to vector<16x256xbf16>
    %c0_1 = arith.constant 0 : index
    %c0_2 = arith.constant 0 : index
    %2 = vector.load %arg2[%c0_1, %c0_2] : memref<256x128xbf16, #tpu.memory_space<vmem>>, vector<256x128xbf16>
    %cst = arith.constant dense<0.000000e+00> : vector<16x128xf32>
    %3 = tpu.matmul %1, %2, %cst {dimension_numbers = #tpu.dot_dimension_numbers<[1], [0], [0], [1], [0, 0, 1, 1], [], []>} : vector<16x256xbf16>, vector<256x128xbf16>, vector<16x128xf32> -> vector<16x128xf32>
    %c0_3 = arith.constant 0 : index
    %c0_4 = arith.constant 0 : index
    %4 = vector.load %arg3[%c0_3, %c0_4] : memref<1x128xf32, #tpu.memory_space<vmem>>, vector<1x128xf32>
    %5 = vector.broadcast %4 : vector<1x128xf32> to vector<16x128xf32>
    %6 = arith.addf %3, %5 : vector<16x128xf32>
    %cst_5 = arith.constant 0.000000e+00 : f32
    %7 = vector.broadcast %cst_5 : f32 to vector<16x128xf32>
    %8 = arith.maximumf %6, %7 : vector<16x128xf32>
    %9 = arith.truncf %8 : vector<16x128xf32> to vector<16x128xbf16>
    %c0_6 = arith.constant 0 : index
    %c0_7 = arith.constant 0 : index
    %10 = vector.load %arg4[%c0_6, %c0_7] : memref<128x128xbf16, #tpu.memory_space<vmem>>, vector<128x128xbf16>
    %cst_8 = arith.constant dense<0.000000e+00> : vector<16x128xf32>
    %11 = tpu.matmul %9, %10, %cst_8 {dimension_numbers = #tpu.dot_dimension_numbers<[1], [0], [0], [1], [0, 0, 1, 1], [], []>} : vector<16x128xbf16>, vector<128x128xbf16>, vector<16x128xf32> -> vector<16x128xf32>
    %c0_9 = arith.constant 0 : index
    %c0_10 = arith.constant 0 : index
    %12 = vector.load %arg5[%c0_9, %c0_10] : memref<1x128xf32, #tpu.memory_space<vmem>>, vector<1x128xf32>
    %13 = vector.broadcast %12 : vector<1x128xf32> to vector<16x128xf32>
    %14 = arith.addf %11, %13 : vector<16x128xf32>
    %cst_11 = arith.constant 0.000000e+00 : f32
    %15 = vector.broadcast %cst_11 : f32 to vector<16x128xf32>
    %16 = arith.maximumf %14, %15 : vector<16x128xf32>
    %17 = arith.truncf %16 : vector<16x128xf32> to vector<16x128xbf16>
    %c0_12 = arith.constant 0 : index
    %c0_13 = arith.constant 0 : index
    %18 = vector.load %arg6[%c0_12, %c0_13] : memref<128x128xbf16, #tpu.memory_space<vmem>>, vector<128x128xbf16>
    %cst_14 = arith.constant dense<0.000000e+00> : vector<16x128xf32>
    %19 = tpu.matmul %17, %18, %cst_14 {dimension_numbers = #tpu.dot_dimension_numbers<[1], [0], [0], [1], [0, 0, 1, 1], [], []>} : vector<16x128xbf16>, vector<128x128xbf16>, vector<16x128xf32> -> vector<16x128xf32>
    %c0_15 = arith.constant 0 : index
    %c0_16 = arith.constant 0 : index
    %20 = vector.load %arg7[%c0_15, %c0_16] : memref<1x128xf32, #tpu.memory_space<vmem>>, vector<1x128xf32>
    %21 = vector.broadcast %20 : vector<1x128xf32> to vector<16x128xf32>
    %22 = arith.addf %19, %21 : vector<16x128xf32>
    %23 = arith.truncf %22 : vector<16x128xf32> to vector<16x128xbf16>
    %c0_17 = arith.constant 0 : index
    %c0_18 = arith.constant 0 : index
    %24 = vector.load %arg8[%c0_17, %c0_18] : memref<128x128xbf16, #tpu.memory_space<vmem>>, vector<128x128xbf16>
    %cst_19 = arith.constant dense<0.000000e+00> : vector<16x128xf32>
    %25 = tpu.matmul %23, %24, %cst_19 {dimension_numbers = #tpu.dot_dimension_numbers<[1], [0], [0], [1], [0, 0, 1, 1], [], []>} : vector<16x128xbf16>, vector<128x128xbf16>, vector<16x128xf32> -> vector<16x128xf32>
    %c0_20 = arith.constant 0 : index
    %c0_21 = arith.constant 0 : index
    %26 = vector.load %arg9[%c0_20, %c0_21] : memref<1x128xf32, #tpu.memory_space<vmem>>, vector<1x128xf32>
    %27 = vector.broadcast %26 : vector<1x128xf32> to vector<16x128xf32>
    %28 = arith.addf %25, %27 : vector<16x128xf32>
    %cst_22 = arith.constant 0.000000e+00 : f32
    %29 = vector.broadcast %cst_22 : f32 to vector<16x128xf32>
    %30 = arith.maximumf %28, %29 : vector<16x128xf32>
    %31 = arith.truncf %30 : vector<16x128xf32> to vector<16x128xbf16>
    %c0_23 = arith.constant 0 : index
    %c0_24 = arith.constant 0 : index
    %32 = vector.load %arg10[%c0_23, %c0_24] : memref<128x128xbf16, #tpu.memory_space<vmem>>, vector<128x128xbf16>
    %cst_25 = arith.constant dense<0.000000e+00> : vector<16x128xf32>
    %33 = tpu.matmul %31, %32, %cst_25 {dimension_numbers = #tpu.dot_dimension_numbers<[1], [0], [0], [1], [0, 0, 1, 1], [], []>} : vector<16x128xbf16>, vector<128x128xbf16>, vector<16x128xf32> -> vector<16x128xf32>
    %c0_26 = arith.constant 0 : index
    %c0_27 = arith.constant 0 : index
    %34 = vector.load %arg11[%c0_26, %c0_27] : memref<1x128xf32, #tpu.memory_space<vmem>>, vector<1x128xf32>
    %35 = vector.broadcast %34 : vector<1x128xf32> to vector<16x128xf32>
    %36 = arith.addf %33, %35 : vector<16x128xf32>
    %cst_28 = arith.constant 0.000000e+00 : f32
    %37 = vector.broadcast %cst_28 : f32 to vector<16x128xf32>
    %38 = arith.maximumf %36, %37 : vector<16x128xf32>
    %39 = arith.truncf %38 : vector<16x128xf32> to vector<16x128xbf16>
    %c0_29 = arith.constant 0 : index
    %c0_30 = arith.constant 0 : index
    %40 = vector.load %arg12[%c0_29, %c0_30] : memref<128x256xbf16, #tpu.memory_space<vmem>>, vector<128x256xbf16>
    %cst_31 = arith.constant dense<0.000000e+00> : vector<16x256xf32>
    %41 = tpu.matmul %39, %40, %cst_31 {dimension_numbers = #tpu.dot_dimension_numbers<[1], [0], [0], [1], [0, 0, 1, 1], [], []>} : vector<16x128xbf16>, vector<128x256xbf16>, vector<16x256xf32> -> vector<16x256xf32>
    %c0_32 = arith.constant 0 : index
    %c0_33 = arith.constant 0 : index
    %42 = vector.load %arg13[%c0_32, %c0_33] : memref<1x256xf32, #tpu.memory_space<vmem>>, vector<1x256xf32>
    %43 = vector.broadcast %42 : vector<1x256xf32> to vector<16x256xf32>
    %44 = arith.addf %41, %43 : vector<16x256xf32>
    %c0_34 = arith.constant 0 : index
    %c0_35 = arith.constant 0 : index
    %45 = vector.load %arg14[%c0_34, %c0_35] : memref<16x256xf32, #tpu.memory_space<vmem>>, vector<16x256xf32>
    tpu.vector_store %arg14[%c0_34, %c0_35], %44 {strides = array<i32>} : memref<16x256xf32, #tpu.memory_space<vmem>>, vector<16x256xf32>,
    return
  }
  func.func @transform_0(%arg0: i32) -> (i32, i32) {
    %c0_i32 = arith.constant 0 : i32
    %c0_i32_0 = arith.constant 0 : i32
    return %arg0, %c0_i32 : i32, i32
  }
  func.func @transform_1(%arg0: i32) -> (i32, i32) {
    %c0_i32 = arith.constant 0 : i32
    %c0_i32_0 = arith.constant 0 : i32
    %c0_i32_1 = arith.constant 0 : i32
    return %c0_i32, %c0_i32_0 : i32, i32
  }
  func.func @transform_2(%arg0: i32) -> (i32, i32) {
    %c0_i32 = arith.constant 0 : i32
    %c0_i32_0 = arith.constant 0 : i32
    %c0_i32_1 = arith.constant 0 : i32
    return %c0_i32, %c0_i32_0 : i32, i32
  }
  func.func @transform_3(%arg0: i32) -> (i32, i32) {
    %c0_i32 = arith.constant 0 : i32
    %c0_i32_0 = arith.constant 0 : i32
    %c0_i32_1 = arith.constant 0 : i32
    return %c0_i32, %c0_i32_0 : i32, i32
  }
  func.func @transform_4(%arg0: i32) -> (i32, i32) {
    %c0_i32 = arith.constant 0 : i32
    %c0_i32_0 = arith.constant 0 : i32
    %c0_i32_1 = arith.constant 0 : i32
    return %c0_i32, %c0_i32_0 : i32, i32
  }
  func.func @transform_5(%arg0: i32) -> (i32, i32) {
    %c0_i32 = arith.constant 0 : i32
    %c0_i32_0 = arith.constant 0 : i32
    %c0_i32_1 = arith.constant 0 : i32
    return %c0_i32, %c0_i32_0 : i32, i32
  }
  func.func @transform_6(%arg0: i32) -> (i32, i32) {
    %c0_i32 = arith.constant 0 : i32
    %c0_i32_0 = arith.constant 0 : i32
    %c0_i32_1 = arith.constant 0 : i32
    return %c0_i32, %c0_i32_0 : i32, i32
  }
  func.func @transform_7(%arg0: i32) -> (i32, i32) {
    %c0_i32 = arith.constant 0 : i32
    %c0_i32_0 = arith.constant 0 : i32
    %c0_i32_1 = arith.constant 0 : i32
    return %c0_i32, %c0_i32_0 : i32, i32
  }
  func.func @transform_8(%arg0: i32) -> (i32, i32) {
    %c0_i32 = arith.constant 0 : i32
    %c0_i32_0 = arith.constant 0 : i32
    %c0_i32_1 = arith.constant 0 : i32
    return %c0_i32, %c0_i32_0 : i32, i32
  }
  func.func @transform_9(%arg0: i32) -> (i32, i32) {
    %c0_i32 = arith.constant 0 : i32
    %c0_i32_0 = arith.constant 0 : i32
    %c0_i32_1 = arith.constant 0 : i32
    return %c0_i32, %c0_i32_0 : i32, i32
  }
  func.func @transform_10(%arg0: i32) -> (i32, i32) {
    %c0_i32 = arith.constant 0 : i32
    %c0_i32_0 = arith.constant 0 : i32
    %c0_i32_1 = arith.constant 0 : i32
    return %c0_i32, %c0_i32_0 : i32, i32
  }
  func.func @transform_11(%arg0: i32) -> (i32, i32) {
    %c0_i32 = arith.constant 0 : i32
    %c0_i32_0 = arith.constant 0 : i32
    %c0_i32_1 = arith.constant 0 : i32
    return %c0_i32, %c0_i32_0 : i32, i32
  }
  func.func @transform_12(%arg0: i32) -> (i32, i32) {
    %c0_i32 = arith.constant 0 : i32
    %c0_i32_0 = arith.constant 0 : i32
    %c0_i32_1 = arith.constant 0 : i32
    return %c0_i32, %c0_i32_0 : i32, i32
  }
  func.func @transform_13(%arg0: i32) -> (i32, i32) {
    %c0_i32 = arith.constant 0 : i32
    %c0_i32_0 = arith.constant 0 : i32
    return %arg0, %c0_i32 : i32, i32
  }
}

</mosaic_0001>

<llo_original>
// kernel: tpu_custom_call.1
$region0: #{tpu_custom_call.1}
  #allocation0 [shape = 'u32[]', space=smem, size = 0x4, offset = 0x4, fixed_abs, tag = 'smem constant byte address 0x4 - core index']
  #allocation1 [shape = 'u32[72,128]{1,0:T(1,128)}', space=vmem, size = 0x9000, scoped, tag = 'internal scratch']
  %s0 = inlined_call_operand.hbm [shape: f32[16,256], index: 0, kind: input, shape index: {}]
  %s1 = inlined_call_operand.hbm [shape: bf16[256,128], index: 1, kind: input, shape index: {}]
  %s2 = inlined_call_operand.vmem [shape: f32[1,128], index: 2, kind: input, shape index: {}]
  %s3 = inlined_call_operand.hbm [shape: bf16[128,128], index: 3, kind: input, shape index: {}]
  %s4 = inlined_call_operand.hbm [shape: f32[1,128], index: 4, kind: input, shape index: {}]
  %s5 = inlined_call_operand.hbm [shape: bf16[128,128], index: 5, kind: input, shape index: {}]
  %s6 = inlined_call_operand.vmem [shape: f32[1,128], index: 6, kind: input, shape index: {}]
  %s7 = inlined_call_operand.hbm [shape: bf16[128,128], index: 7, kind: input, shape index: {}]
  %s8 = inlined_call_operand.vmem [shape: f32[1,128], index: 8, kind: input, shape index: {}]
  %s9 = inlined_call_operand.hbm [shape: bf16[128,128], index: 9, kind: input, shape index: {}]
  %s10 = inlined_call_operand.vmem [shape: f32[1,128], index: 10, kind: input, shape index: {}]
  %s11 = inlined_call_operand.hbm [shape: bf16[128,256], index: 11, kind: input, shape index: {}]
  %s12 = inlined_call_operand.vmem [shape: f32[1,256], index: 12, kind: input, shape index: {}]
  %s13 = inlined_call_operand.hbm [shape: f32[16,256], index: 13, kind: output, shape index: {}]
  %s14 = sld [smem:[#allocation0]]
  $region94: #{tpu_custom_call.1} parent=0
    _
  %s16 = ssub.s32 1, %s14
  %s17 = scalar_select 0, %s16, %s14
  $region1: #{tpu_custom_call.1} parent=0
    #allocation2 [shape = 'u8[16384]{0}', space=vmem, size = 0x4000, scoped, tag = 'input window, operand 0, single buffered']
    #allocation3 [shape = 's32[1]{0}', space=sflag, size = 0x4, scoped, tag = 'scoped memory for tpu_custom_call.1']
    #allocation4 [shape = 's32[1]{0}', space=sflag, size = 0x4, scoped, tag = 'scoped memory for tpu_custom_call.1']
    #allocation5 [shape = 'u8[65536]{0}', space=vmem, size = 0x10000, scoped, tag = 'input window, operand 1, single buffered']
    #allocation6 [shape = 's32[1]{0}', space=sflag, size = 0x4, scoped, tag = 'scoped memory for tpu_custom_call.1']
    #allocation7 [shape = 'u8[32768]{0}', space=vmem, size = 0x8000, scoped, tag = 'input window, operand 3, single buffered']
    #allocation8 [shape = 'u8[512]{0}', space=vmem, size = 0x400, scoped, tag = 'input window, operand 4, single buffered']
    #allocation9 [shape = 's32[1]{0}', space=sflag, size = 0x4, scoped, tag = 'scoped memory for tpu_custom_call.1']
    #allocation10 [shape = 'u8[32768]{0}', space=vmem, size = 0x8000, scoped, tag = 'input window, operand 5, single buffered']
    #allocation11 [shape = 'u8[32768]{0}', space=vmem, size = 0x8000, scoped, tag = 'input window, operand 7, single buffered']
    #allocation12 [shape = 's32[1]{0}', space=sflag, size = 0x4, scoped, tag = 'scoped memory for tpu_custom_call.1']
    #allocation13 [shape = 'u8[32768]{0}', space=vmem, size = 0x8000, scoped, tag = 'input window, operand 9, single buffered']
    #allocation14 [shape = 'u8[65536]{0}', space=vmem, size = 0x10000, scoped, tag = 'input window, operand 11, single buffered']
    #allocation15 [shape = 's32[1]{0}', space=sflag, size = 0x4, scoped, tag = 'scoped memory for tpu_custom_call.1']
    #allocation16 [shape = 'u8[16384]{0}', space=vmem, size = 0x4000, scoped, tag = 'output window, operand 0, single buffered']
    %18 = vsyncpa [#allocation3], 0
    %19 = vsyncpa [#allocation6], 0
    %20 = vsyncpa [#allocation9], 0
    %21 = vsyncpa [#allocation12], 0
    %22 = vsyncpa [#allocation15], 0
    %23 = vsyncpa [#allocation4], 0
    // Predicated region
    $region2: #{tpu_custom_call.1} parent=1 // pred_check
      _
    $region3: #{tpu_custom_call.1} parent=1 // pred_check_branch
      %25 = sbr.rel (0) target = $region5
    $region4: #{tpu_custom_call.1} parent=1 // pred_region
      %27 = vsyncadd [#allocation3], 0
      %s28 = sshll.u32 %s0, 4
      %s29 = int_to_ptr.hbm [resolvable:$true] %s28
      %s30 = sshll.u32 [#allocation2], 4
      %s31 = int_to_ptr.vmem [resolvable:$true] %s30
      %36 = dma.hbm_to_vmem [thread:$0]  %s29, 512, %s31, [#allocation3], 256, 256, 16
    $region5: #{tpu_custom_call.1} parent=1 // pred_fallthru
      _
    // Predicated region
    $region6: #{tpu_custom_call.1} parent=1 // pred_check
      _
    $region7: #{tpu_custom_call.1} parent=1 // pred_check_branch
      %38 = sbr.rel (0) target = $region9
    $region8: #{tpu_custom_call.1} parent=1 // pred_region
      %40 = vsyncadd [#allocation6], 0
      %s41 = sshll.u32 %s1, 4
      %s42 = int_to_ptr.hbm [resolvable:$true] %s41
      %s43 = sshll.u32 [#allocation5], 4
      %s44 = int_to_ptr.vmem [resolvable:$true] %s43
      %49 = dma.hbm_to_vmem [thread:$0]  %s42, 2048, %s44, [#allocation6], 64, 64, 4
    $region9: #{tpu_custom_call.1} parent=1 // pred_fallthru
      _
    // Predicated region
    $region10: #{tpu_custom_call.1} parent=1 // pred_check
      _
    $region11: #{tpu_custom_call.1} parent=1 // pred_check_branch
      %51 = sbr.rel (0) target = $region13
    $region12: #{tpu_custom_call.1} parent=1 // pred_region
      _
    $region13: #{tpu_custom_call.1} parent=1 // pred_fallthru
      _
    // Predicated region
    $region14: #{tpu_custom_call.1} parent=1 // pred_check
      _
    $region15: #{tpu_custom_call.1} parent=1 // pred_check_branch
      %53 = sbr.rel (0) target = $region17
    $region16: #{tpu_custom_call.1} parent=1 // pred_region
      %55 = vsyncadd [#allocation6], 0
      %s56 = sshll.u32 %s3, 4
      %s57 = int_to_ptr.hbm [resolvable:$true] %s56
      %s58 = sshll.u32 [#allocation7], 4
      %s59 = int_to_ptr.vmem [resolvable:$true] %s58
      %64 = dma.hbm_to_vmem [thread:$0]  %s57, 1024, %s59, [#allocation6], 64, 64, 4
    $region17: #{tpu_custom_call.1} parent=1 // pred_fallthru
      _
    // Predicated region
    $region18: #{tpu_custom_call.1} parent=1 // pred_check
      _
    $region19: #{tpu_custom_call.1} parent=1 // pred_check_branch
      %66 = sbr.rel (0) target = $region21
    $region20: #{tpu_custom_call.1} parent=1 // pred_region
      %68 = vsyncadd [#allocation9], 0
      %s70 = sshll.u32 %s4, 4
      %s71 = int_to_ptr.hbm [resolvable:$true] %s70
      %s72 = sshll.u32 [#allocation8], 4
      %s73 = int_to_ptr.vmem [resolvable:$true] %s72
      %75 = dma.hbm_to_vmem [thread:$0]  %s71, 16, %s73, [#allocation9]
    $region21: #{tpu_custom_call.1} parent=1 // pred_fallthru
      _
    // Predicated region
    $region22: #{tpu_custom_call.1} parent=1 // pred_check
      _
    $region23: #{tpu_custom_call.1} parent=1 // pred_check_branch
      %77 = sbr.rel (0) target = $region25
    $region24: #{tpu_custom_call.1} parent=1 // pred_region
      %79 = vsyncadd [#allocation9], 0
      %s80 = sshll.u32 %s5, 4
      %s81 = int_to_ptr.hbm [resolvable:$true] %s80
      %s82 = sshll.u32 [#allocation10], 4
      %s83 = int_to_ptr.vmem [resolvable:$true] %s82
      %88 = dma.hbm_to_vmem [thread:$0]  %s81, 1024, %s83, [#allocation9], 64, 64, 4
    $region25: #{tpu_custom_call.1} parent=1 // pred_fallthru
      _
    // Predicated region
    $region26: #{tpu_custom_call.1} parent=1 // pred_check
      _
    $region27: #{tpu_custom_call.1} parent=1 // pred_check_branch
      %90 = sbr.rel (0) target = $region29
    $region28: #{tpu_custom_call.1} parent=1 // pred_region
      _
    $region29: #{tpu_custom_call.1} parent=1 // pred_fallthru
      _
    // Predicated region
    $region30: #{tpu_custom_call.1} parent=1 // pred_check
      _
    $region31: #{tpu_custom_call.1} parent=1 // pred_check_branch
      %92 = sbr.rel (0) target = $region33
    $region32: #{tpu_custom_call.1} parent=1 // pred_region
      %94 = vsyncadd [#allocation12], 0
      %s95 = sshll.u32 %s7, 4
      %s96 = int_to_ptr.hbm [resolvable:$true] %s95
      %s97 = sshll.u32 [#allocation11], 4
      %s98 = int_to_ptr.vmem [resolvable:$true] %s97
      %103 = dma.hbm_to_vmem [thread:$0]  %s96, 1024, %s98, [#allocation12], 64, 64, 4
    $region33: #{tpu_custom_call.1} parent=1 // pred_fallthru
      _
    // Predicated region
    $region34: #{tpu_custom_call.1} parent=1 // pred_check
      _
    $region35: #{tpu_custom_call.1} parent=1 // pred_check_branch
      %105 = sbr.rel (0) target = $region37
    $region36: #{tpu_custom_call.1} parent=1 // pred_region
      _
    $region37: #{tpu_custom_call.1} parent=1 // pred_fallthru
      _
    // Predicated region
    $region38: #{tpu_custom_call.1} parent=1 // pred_check
      _
    $region39: #{tpu_custom_call.1} parent=1 // pred_check_branch
      %107 = sbr.rel (0) target = $region41
    $region40: #{tpu_custom_call.1} parent=1 // pred_region
      %109 = vsyncadd [#allocation12], 0
      %s110 = sshll.u32 %s9, 4
      %s111 = int_to_ptr.hbm [resolvable:$true] %s110
      %s112 = sshll.u32 [#allocation13], 4
      %s113 = int_to_ptr.vmem [resolvable:$true] %s112
      %118 = dma.hbm_to_vmem [thread:$0]  %s111, 1024, %s113, [#allocation12], 64, 64, 4
    $region41: #{tpu_custom_call.1} parent=1 // pred_fallthru
      _
    // Predicated region
    $region42: #{tpu_custom_call.1} parent=1 // pred_check
      _
    $region43: #{tpu_custom_call.1} parent=1 // pred_check_branch
      %120 = sbr.rel (0) target = $region45
    $region44: #{tpu_custom_call.1} parent=1 // pred_region
      _
    $region45: #{tpu_custom_call.1} parent=1 // pred_fallthru
      _
    // Predicated region
    $region46: #{tpu_custom_call.1} parent=1 // pred_check
      _
    $region47: #{tpu_custom_call.1} parent=1 // pred_check_branch
      %122 = sbr.rel (0) target = $region49
    $region48: #{tpu_custom_call.1} parent=1 // pred_region
      %124 = vsyncadd [#allocation15], 0
      %s125 = sshll.u32 %s11, 4
      %s126 = int_to_ptr.hbm [resolvable:$true] %s125
      %s127 = sshll.u32 [#allocation14], 4
      %s128 = int_to_ptr.vmem [resolvable:$true] %s127
      %133 = dma.hbm_to_vmem [thread:$0]  %s126, 2048, %s128, [#allocation15], 128, 128, 8
    $region49: #{tpu_custom_call.1} parent=1 // pred_fallthru
      _
    // Predicated region
    $region50: #{tpu_custom_call.1} parent=1 // pred_check
      _
    $region51: #{tpu_custom_call.1} parent=1 // pred_check_branch
      %135 = sbr.rel (0) target = $region53
    $region52: #{tpu_custom_call.1} parent=1 // pred_region
      _
    $region53: #{tpu_custom_call.1} parent=1 // pred_fallthru
      _
    // Predicated region
    $region54: #{tpu_custom_call.1} parent=1 // pred_check
      _
    $region55: #{tpu_custom_call.1} parent=1 // pred_check_branch
      %137 = sbr.rel (0) target = $region57
    $region56: #{tpu_custom_call.1} parent=1 // pred_region
      %139 = dma.done [#allocation3], 512
    $region57: #{tpu_custom_call.1} parent=1 // pred_fallthru
      _
    // Predicated region
    $region58: #{tpu_custom_call.1} parent=1 // pred_check
      _
    $region59: #{tpu_custom_call.1} parent=1 // pred_check_branch
      %141 = sbr.rel (0) target = $region61
    $region60: #{tpu_custom_call.1} parent=1 // pred_region
      %143 = dma.done [#allocation6], 2048
    $region61: #{tpu_custom_call.1} parent=1 // pred_fallthru
      _
    // Predicated region
    $region62: #{tpu_custom_call.1} parent=1 // pred_check
      _
    $region63: #{tpu_custom_call.1} parent=1 // pred_check_branch
      %145 = sbr.rel (0) target = $region65
    $region64: #{tpu_custom_call.1} parent=1 // pred_region
      %147 = dma.done [#allocation6], 1024
    $region65: #{tpu_custom_call.1} parent=1 // pred_fallthru
      _
    // Predicated region
    $region66: #{tpu_custom_call.1} parent=1 // pred_check
      _
    $region67: #{tpu_custom_call.1} parent=1 // pred_check_branch
      %149 = sbr.rel (0) target = $region69
    $region68: #{tpu_custom_call.1} parent=1 // pred_region
      %151 = dma.done [#allocation9], 16
    $region69: #{tpu_custom_call.1} parent=1 // pred_fallthru
      _
    // Predicated region
    $region70: #{tpu_custom_call.1} parent=1 // pred_check
      _
    $region71: #{tpu_custom_call.1} parent=1 // pred_check_branch
      %153 = sbr.rel (0) target = $region73
    $region72: #{tpu_custom_call.1} parent=1 // pred_region
      %155 = dma.done [#allocation9], 1024
    $region73: #{tpu_custom_call.1} parent=1 // pred_fallthru
      _
    // Predicated region
    $region74: #{tpu_custom_call.1} parent=1 // pred_check
      _
    $region75: #{tpu_custom_call.1} parent=1 // pred_check_branch
      %157 = sbr.rel (0) target = $region77
    $region76: #{tpu_custom_call.1} parent=1 // pred_region
      %159 = dma.done [#allocation12], 1024
    $region77: #{tpu_custom_call.1} parent=1 // pred_fallthru
      _
    // Predicated region
    $region78: #{tpu_custom_call.1} parent=1 // pred_check
      _
    $region79: #{tpu_custom_call.1} parent=1 // pred_check_branch
      %161 = sbr.rel (0) target = $region81
    $region80: #{tpu_custom_call.1} parent=1 // pred_region
      %163 = dma.done [#allocation12], 1024
    $region81: #{tpu_custom_call.1} parent=1 // pred_fallthru
      _
    // Predicated region
    $region82: #{tpu_custom_call.1} parent=1 // pred_check
      _
    $region83: #{tpu_custom_call.1} parent=1 // pred_check_branch
      %165 = sbr.rel (0) target = $region85
    $region84: #{tpu_custom_call.1} parent=1 // pred_region
      %167 = dma.done [#allocation15], 2048
    $region85: #{tpu_custom_call.1} parent=1 // pred_fallthru
      _
    %v168 = vld [vmem:[#allocation2] sm:$0xff]
    %v169 = vld [vmem:[#allocation2 + $0x8] sm:$0xff]
    %v170 = vld [vmem:[#allocation2 + $0x10] sm:$0xff]
    %v171 = vld [vmem:[#allocation2 + $0x18] sm:$0xff]
    %v172 = vpack.c.bf16 %v170, %v168
    %v173 = vpack.c.bf16 %v171, %v169
    %v174 = vld [vmem:[#allocation5] sm:$0xf]
    %v175 = vld [vmem:[#allocation5 + $0x4] sm:$0xf]
    %v176 = vld [vmem:[#allocation5 + $0x8] sm:$0xf]
    %v177 = vld [vmem:[#allocation5 + $0xc] sm:$0xf]
    %v178 = vld [vmem:[#allocation5 + $0x10] sm:$0xf]
    %v179 = vld [vmem:[#allocation5 + $0x14] sm:$0xf]
    %v180 = vld [vmem:[#allocation5 + $0x18] sm:$0xf]
    %v181 = vld [vmem:[#allocation5 + $0x1c] sm:$0xf]
    %v182 = vld [vmem:[#allocation5 + $0x20] sm:$0xf]
    %v183 = vld [vmem:[#allocation5 + $0x24] sm:$0xf]
    %v184 = vld [vmem:[#allocation5 + $0x28] sm:$0xf]
    %v185 = vld [vmem:[#allocation5 + $0x2c] sm:$0xf]
    %v186 = vld [vmem:[#allocation5 + $0x30] sm:$0xf]
    %v187 = vld [vmem:[#allocation5 + $0x34] sm:$0xf]
    %v188 = vld [vmem:[#allocation5 + $0x38] sm:$0xf]
    %v189 = vld [vmem:[#allocation5 + $0x3c] sm:$0xf]
    %v190 = vld [vmem:[#allocation5 + $0x40] sm:$0xf]
    %v191 = vld [vmem:[#allocation5 + $0x44] sm:$0xf]
    %v192 = vld [vmem:[#allocation5 + $0x48] sm:$0xf]
    %v193 = vld [vmem:[#allocation5 + $0x4c] sm:$0xf]
    %v194 = vld [vmem:[#allocation5 + $0x50] sm:$0xf]
    %v195 = vld [vmem:[#allocation5 + $0x54] sm:$0xf]
    %v196 = vld [vmem:[#allocation5 + $0x58] sm:$0xf]
    %v197 = vld [vmem:[#allocation5 + $0x5c] sm:$0xf]
    %v198 = vld [vmem:[#allocation5 + $0x60] sm:$0xf]
    %v199 = vld [vmem:[#allocation5 + $0x64] sm:$0xf]
    %v200 = vld [vmem:[#allocation5 + $0x68] sm:$0xf]
    %v201 = vld [vmem:[#allocation5 + $0x6c] sm:$0xf]
    %v202 = vld [vmem:[#allocation5 + $0x70] sm:$0xf]
    %v203 = vld [vmem:[#allocation5 + $0x74] sm:$0xf]
    %v204 = vld [vmem:[#allocation5 + $0x78] sm:$0xf]
    %v205 = vld [vmem:[#allocation5 + $0x7c] sm:$0xf]
    %v206 = vld [vmem:[%s2] sm:$0x1]
    %v208 = vperm.slane %v206, 0
    %v242 = vunpack.c.l.b16 %v174
    %v243 = vunpack.c.l.b16 %v175
    %v244 = vunpack.c.l.b16 %v176
    %v245 = vunpack.c.l.b16 %v177
    %v246 = vunpack.c.l.b16 %v178
    %v247 = vunpack.c.l.b16 %v179
    %v248 = vunpack.c.l.b16 %v180
    %v249 = vunpack.c.l.b16 %v181
    %v250 = vunpack.c.l.b16 %v182
    %v251 = vunpack.c.l.b16 %v183
    %v252 = vunpack.c.l.b16 %v184
    %v253 = vunpack.c.l.b16 %v185
    %v254 = vunpack.c.l.b16 %v186
    %v255 = vunpack.c.l.b16 %v187
    %v256 = vunpack.c.l.b16 %v188
    %v257 = vunpack.c.l.b16 %v189
    %v258 = vunpack.c.l.b16 %v190
    %v259 = vunpack.c.l.b16 %v191
    %v260 = vunpack.c.l.b16 %v192
    %v261 = vunpack.c.l.b16 %v193
    %v262 = vunpack.c.l.b16 %v194
    %v263 = vunpack.c.l.b16 %v195
    %v264 = vunpack.c.l.b16 %v196
    %v265 = vunpack.c.l.b16 %v197
    %v266 = vunpack.c.l.b16 %v198
    %v267 = vunpack.c.l.b16 %v199
    %v268 = vunpack.c.l.b16 %v200
    %v269 = vunpack.c.l.b16 %v201
    %v270 = vunpack.c.l.b16 %v202
    %v271 = vunpack.c.l.b16 %v203
    %v272 = vunpack.c.l.b16 %v204
    %v273 = vunpack.c.l.b16 %v205
    %v274 = vpack.c.b16 %v243, %v242
    %v275 = vpack.c.b16 %v245, %v244
    %v276 = vpack.c.b16 %v247, %v246
    %v277 = vpack.c.b16 %v249, %v248
    %v278 = vpack.c.b16 %v251, %v250
    %v279 = vpack.c.b16 %v253, %v252
    %v280 = vpack.c.b16 %v255, %v254
    %v281 = vpack.c.b16 %v257, %v256
    %v282 = vpack.c.b16 %v259, %v258
    %v283 = vpack.c.b16 %v261, %v260
    %v284 = vpack.c.b16 %v263, %v262
    %v285 = vpack.c.b16 %v265, %v264
    %v286 = vpack.c.b16 %v267, %v266
    %v287 = vpack.c.b16 %v269, %v268
    %v288 = vpack.c.b16 %v271, %v270
    %v289 = vpack.c.b16 %v273, %v272
    %306 = vmatpush.bf16.msra.mxu0 %v281
    %307 = vmatpush.bf16.msra.mxu0 %v280
    %308 = vmatpush.bf16.msra.mxu0 %v279
    %309 = vmatpush.bf16.msra.mxu0 %v278
    %310 = vmatpush.bf16.msra.mxu0 %v277
    %311 = vmatpush.bf16.msra.mxu0 %v276
    %312 = vmatpush.bf16.msra.mxu0 %v275
    %313 = vmatpush.bf16.msra.mxu0 %v274
    %314 = vmatmul.bf16.gmra.mxu0 %v172
    %v315 = vpop.f32.mrf.mxu0
    %v316 = vadd.f32 %v208, %v315
    %v317 = vpop.f32.mrf.mxu0
    %v318 = vadd.f32 %v208, %v317
    %319 = vdwg.mxu0
    %320 = vmatpush.bf16.msra.mxu0 %v289
    %321 = vmatpush.bf16.msra.mxu0 %v288
    %322 = vmatpush.bf16.msra.mxu0 %v287
    %323 = vmatpush.bf16.msra.mxu0 %v286
    %324 = vmatpush.bf16.msra.mxu0 %v285
    %325 = vmatpush.bf16.msra.mxu0 %v284
    %326 = vmatpush.bf16.msra.mxu0 %v283
    %327 = vmatpush.bf16.msra.mxu0 %v282
    %328 = vmatmul.bf16.gmra.mxu0 %v173
    %v329 = vpop.f32.mrf.mxu0
    %v330 = vadd.f32 %v316, %v329
    %v331 = vpop.f32.mrf.mxu0
    %v332 = vadd.f32 %v318, %v331
    %333 = vdwg.mxu0
    %v334 = vmax.f32 %v330, 0.0
    %v335 = vmax.f32 %v332, 0.0
    %v336 = vpack.c.bf16 %v335, %v334
    %v337 = vld [vmem:[#allocation7] sm:$0xf]
    %v338 = vld [vmem:[#allocation7 + $0x4] sm:$0xf]
    %v339 = vld [vmem:[#allocation7 + $0x8] sm:$0xf]
    %v340 = vld [vmem:[#allocation7 + $0xc] sm:$0xf]
    %v341 = vld [vmem:[#allocation7 + $0x10] sm:$0xf]
    %v342 = vld [vmem:[#allocation7 + $0x14] sm:$0xf]
    %v343 = vld [vmem:[#allocation7 + $0x18] sm:$0xf]
    %v344 = vld [vmem:[#allocation7 + $0x1c] sm:$0xf]
    %v345 = vld [vmem:[#allocation7 + $0x20] sm:$0xf]
    %v346 = vld [vmem:[#allocation7 + $0x24] sm:$0xf]
    %v347 = vld [vmem:[#allocation7 + $0x28] sm:$0xf]
    %v348 = vld [vmem:[#allocation7 + $0x2c] sm:$0xf]
    %v349 = vld [vmem:[#allocation7 + $0x30] sm:$0xf]
    %v350 = vld [vmem:[#allocation7 + $0x34] sm:$0xf]
    %v351 = vld [vmem:[#allocation7 + $0x38] sm:$0xf]
    %v352 = vld [vmem:[#allocation7 + $0x3c] sm:$0xf]
    %v353 = vld [vmem:[#allocation8] sm:$0x1]
    %v355 = vperm.slane %v353, 0
    %v373 = vunpack.c.l.b16 %v337
    %v374 = vunpack.c.l.b16 %v338
    %v375 = vunpack.c.l.b16 %v339
    %v376 = vunpack.c.l.b16 %v340
    %v377 = vunpack.c.l.b16 %v341
    %v378 = vunpack.c.l.b16 %v342
    %v379 = vunpack.c.l.b16 %v343
    %v380 = vunpack.c.l.b16 %v344
    %v381 = vunpack.c.l.b16 %v345
    %v382 = vunpack.c.l.b16 %v346
    %v383 = vunpack.c.l.b16 %v347
    %v384 = vunpack.c.l.b16 %v348
    %v385 = vunpack.c.l.b16 %v349
    %v386 = vunpack.c.l.b16 %v350
    %v387 = vunpack.c.l.b16 %v351
    %v388 = vunpack.c.l.b16 %v352
    %v389 = vpack.c.b16 %v374, %v373
    %v390 = vpack.c.b16 %v376, %v375
    %v391 = vpack.c.b16 %v378, %v377
    %v392 = vpack.c.b16 %v380, %v379
    %v393 = vpack.c.b16 %v382, %v381
    %v394 = vpack.c.b16 %v384, %v383
    %v395 = vpack.c.b16 %v386, %v385
    %v396 = vpack.c.b16 %v388, %v387
    %405 = vmatpush.bf16.msra.mxu0 %v396
    %406 = vmatpush.bf16.msra.mxu0 %v395
    %407 = vmatpush.bf16.msra.mxu0 %v394
    %408 = vmatpush.bf16.msra.mxu0 %v393
    %409 = vmatpush.bf16.msra.mxu0 %v392
    %410 = vmatpush.bf16.msra.mxu0 %v391
    %411 = vmatpush.bf16.msra.mxu0 %v390
    %412 = vmatpush.bf16.msra.mxu0 %v389
    %413 = vmatmul.bf16.gmra.mxu0 %v336
    %v414 = vpop.f32.mrf.mxu0
    %v415 = vadd.f32 %v355, %v414
    %v416 = vpop.f32.mrf.mxu0
    %v417 = vadd.f32 %v355, %v416
    %418 = vdwg.mxu0
    %v419 = vmax.f32 %v415, 0.0
    %v420 = vmax.f32 %v417, 0.0
    %v421 = vpack.c.bf16 %v420, %v419
    %v422 = vld [vmem:[#allocation10] sm:$0xf]
    %v423 = vld [vmem:[#allocation10 + $0x4] sm:$0xf]
    %v424 = vld [vmem:[#allocation10 + $0x8] sm:$0xf]
    %v425 = vld [vmem:[#allocation10 + $0xc] sm:$0xf]
    %v426 = vld [vmem:[#allocation10 + $0x10] sm:$0xf]
    %v427 = vld [vmem:[#allocation10 + $0x14] sm:$0xf]
    %v428 = vld [vmem:[#allocation10 + $0x18] sm:$0xf]
    %v429 = vld [vmem:[#allocation10 + $0x1c] sm:$0xf]
    %v430 = vld [vmem:[#allocation10 + $0x20] sm:$0xf]
    %v431 = vld [vmem:[#allocation10 + $0x24] sm:$0xf]
    %v432 = vld [vmem:[#allocation10 + $0x28] sm:$0xf]
    %v433 = vld [vmem:[#allocation10 + $0x2c] sm:$0xf]
    %v434 = vld [vmem:[#allocation10 + $0x30] sm:$0xf]
    %v435 = vld [vmem:[#allocation10 + $0x34] sm:$0xf]
    %v436 = vld [vmem:[#allocation10 + $0x38] sm:$0xf]
    %v437 = vld [vmem:[#allocation10 + $0x3c] sm:$0xf]
    %v438 = vld [vmem:[%s6] sm:$0x1]
    %v440 = vperm.slane %v438, 0
    %v458 = vunpack.c.l.b16 %v422
    %v459 = vunpack.c.l.b16 %v423
    %v460 = vunpack.c.l.b16 %v424
    %v461 = vunpack.c.l.b16 %v425
    %v462 = vunpack.c.l.b16 %v426
    %v463 = vunpack.c.l.b16 %v427
    %v464 = vunpack.c.l.b16 %v428
    %v465 = vunpack.c.l.b16 %v429
    %v466 = vunpack.c.l.b16 %v430
    %v467 = vunpack.c.l.b16 %v431
    %v468 = vunpack.c.l.b16 %v432
    %v469 = vunpack.c.l.b16 %v433
    %v470 = vunpack.c.l.b16 %v434
    %v471 = vunpack.c.l.b16 %v435
    %v472 = vunpack.c.l.b16 %v436
    %v473 = vunpack.c.l.b16 %v437
    %v474 = vpack.c.b16 %v459, %v458
    %v475 = vpack.c.b16 %v461, %v460
    %v476 = vpack.c.b16 %v463, %v462
    %v477 = vpack.c.b16 %v465, %v464
    %v478 = vpack.c.b16 %v467, %v466
    %v479 = vpack.c.b16 %v469, %v468
    %v480 = vpack.c.b16 %v471, %v470
    %v481 = vpack.c.b16 %v473, %v472
    %490 = vmatpush.bf16.msra.mxu0 %v481
    %491 = vmatpush.bf16.msra.mxu0 %v480
    %492 = vmatpush.bf16.msra.mxu0 %v479
    %493 = vmatpush.bf16.msra.mxu0 %v478
    %494 = vmatpush.bf16.msra.mxu0 %v477
    %495 = vmatpush.bf16.msra.mxu0 %v476
    %496 = vmatpush.bf16.msra.mxu0 %v475
    %497 = vmatpush.bf16.msra.mxu0 %v474
    %498 = vmatmul.bf16.gmra.mxu0 %v421
    %v499 = vpop.f32.mrf.mxu0
    %v500 = vadd.f32 %v440, %v499
    %v501 = vpop.f32.mrf.mxu0
    %v502 = vadd.f32 %v440, %v501
    %503 = vdwg.mxu0
    %v504 = vpack.c.bf16 %v502, %v500
    %v505 = vld [vmem:[#allocation11] sm:$0xf]
    %v506 = vld [vmem:[#allocation11 + $0x4] sm:$0xf]
    %v507 = vld [vmem:[#allocation11 + $0x8] sm:$0xf]
    %v508 = vld [vmem:[#allocation11 + $0xc] sm:$0xf]
    %v509 = vld [vmem:[#allocation11 + $0x10] sm:$0xf]
    %v510 = vld [vmem:[#allocation11 + $0x14] sm:$0xf]
    %v511 = vld [vmem:[#allocation11 + $0x18] sm:$0xf]
    %v512 = vld [vmem:[#allocation11 + $0x1c] sm:$0xf]
    %v513 = vld [vmem:[#allocation11 + $0x20] sm:$0xf]
    %v514 = vld [vmem:[#allocation11 + $0x24] sm:$0xf]
    %v515 = vld [vmem:[#allocation11 + $0x28] sm:$0xf]
    %v516 = vld [vmem:[#allocation11 + $0x2c] sm:$0xf]
    %v517 = vld [vmem:[#allocation11 + $0x30] sm:$0xf]
    %v518 = vld [vmem:[#allocation11 + $0x34] sm:$0xf]
    %v519 = vld [vmem:[#allocation11 + $0x38] sm:$0xf]
    %v520 = vld [vmem:[#allocation11 + $0x3c] sm:$0xf]
    %v521 = vld [vmem:[%s8] sm:$0x1]
    %v523 = vperm.slane %v521, 0
    %v541 = vunpack.c.l.b16 %v505
    %v542 = vunpack.c.l.b16 %v506
    %v543 = vunpack.c.l.b16 %v507
    %v544 = vunpack.c.l.b16 %v508
    %v545 = vunpack.c.l.b16 %v509
    %v546 = vunpack.c.l.b16 %v510
    %v547 = vunpack.c.l.b16 %v511
    %v548 = vunpack.c.l.b16 %v512
    %v549 = vunpack.c.l.b16 %v513
    %v550 = vunpack.c.l.b16 %v514
    %v551 = vunpack.c.l.b16 %v515
    %v552 = vunpack.c.l.b16 %v516
    %v553 = vunpack.c.l.b16 %v517
    %v554 = vunpack.c.l.b16 %v518
    %v555 = vunpack.c.l.b16 %v519
    %v556 = vunpack.c.l.b16 %v520
    %v557 = vpack.c.b16 %v542, %v541
    %v558 = vpack.c.b16 %v544, %v543
    %v559 = vpack.c.b16 %v546, %v545
    %v560 = vpack.c.b16 %v548, %v547
    %v561 = vpack.c.b16 %v550, %v549
    %v562 = vpack.c.b16 %v552, %v551
    %v563 = vpack.c.b16 %v554, %v553
    %v564 = vpack.c.b16 %v556, %v555
    %573 = vmatpush.bf16.msra.mxu0 %v564
    %574 = vmatpush.bf16.msra.mxu0 %v563
    %575 = vmatpush.bf16.msra.mxu0 %v562
    %576 = vmatpush.bf16.msra.mxu0 %v561
    %577 = vmatpush.bf16.msra.mxu0 %v560
    %578 = vmatpush.bf16.msra.mxu0 %v559
    %579 = vmatpush.bf16.msra.mxu0 %v558
    %580 = vmatpush.bf16.msra.mxu0 %v557
    %581 = vmatmul.bf16.gmra.mxu0 %v504
    %v582 = vpop.f32.mrf.mxu0
    %v583 = vadd.f32 %v523, %v582
    %v584 = vpop.f32.mrf.mxu0
    %v585 = vadd.f32 %v523, %v584
    %586 = vdwg.mxu0
    %v587 = vmax.f32 %v583, 0.0
    %v588 = vmax.f32 %v585, 0.0
    %v589 = vpack.c.bf16 %v588, %v587
    %v590 = vld [vmem:[#allocation13] sm:$0xf]
    %v591 = vld [vmem:[#allocation13 + $0x4] sm:$0xf]
    %v592 = vld [vmem:[#allocation13 + $0x8] sm:$0xf]
    %v593 = vld [vmem:[#allocation13 + $0xc] sm:$0xf]
    %v594 = vld [vmem:[#allocation13 + $0x10] sm:$0xf]
    %v595 = vld [vmem:[#allocation13 + $0x14] sm:$0xf]
    %v596 = vld [vmem:[#allocation13 + $0x18] sm:$0xf]
    %v597 = vld [vmem:[#allocation13 + $0x1c] sm:$0xf]
    %v598 = vld [vmem:[#allocation13 + $0x20] sm:$0xf]
    %v599 = vld [vmem:[#allocation13 + $0x24] sm:$0xf]
    %v600 = vld [vmem:[#allocation13 + $0x28] sm:$0xf]
    %v601 = vld [vmem:[#allocation13 + $0x2c] sm:$0xf]
    %v602 = vld [vmem:[#allocation13 + $0x30] sm:$0xf]
    %v603 = vld [vmem:[#allocation13 + $0x34] sm:$0xf]
    %v604 = vld [vmem:[#allocation13 + $0x38] sm:$0xf]
    %v605 = vld [vmem:[#allocation13 + $0x3c] sm:$0xf]
    %v606 = vld [vmem:[%s10] sm:$0x1]
    %v608 = vperm.slane %v606, 0
    %v626 = vunpack.c.l.b16 %v590
    %v627 = vunpack.c.l.b16 %v591
    %v628 = vunpack.c.l.b16 %v592
    %v629 = vunpack.c.l.b16 %v593
    %v630 = vunpack.c.l.b16 %v594
    %v631 = vunpack.c.l.b16 %v595
    %v632 = vunpack.c.l.b16 %v596
    %v633 = vunpack.c.l.b16 %v597
    %v634 = vunpack.c.l.b16 %v598
    %v635 = vunpack.c.l.b16 %v599
    %v636 = vunpack.c.l.b16 %v600
    %v637 = vunpack.c.l.b16 %v601
    %v638 = vunpack.c.l.b16 %v602
    %v639 = vunpack.c.l.b16 %v603
    %v640 = vunpack.c.l.b16 %v604
    %v641 = vunpack.c.l.b16 %v605
    %v642 = vpack.c.b16 %v627, %v626
    %v643 = vpack.c.b16 %v629, %v628
    %v644 = vpack.c.b16 %v631, %v630
    %v645 = vpack.c.b16 %v633, %v632
    %v646 = vpack.c.b16 %v635, %v634
    %v647 = vpack.c.b16 %v637, %v636
    %v648 = vpack.c.b16 %v639, %v638
    %v649 = vpack.c.b16 %v641, %v640
    %658 = vmatpush.bf16.msra.mxu0 %v649
    %659 = vmatpush.bf16.msra.mxu0 %v648
    %660 = vmatpush.bf16.msra.mxu0 %v647
    %661 = vmatpush.bf16.msra.mxu0 %v646
    %662 = vmatpush.bf16.msra.mxu0 %v645
    %663 = vmatpush.bf16.msra.mxu0 %v644
    %664 = vmatpush.bf16.msra.mxu0 %v643
    %665 = vmatpush.bf16.msra.mxu0 %v642
    %666 = vmatmul.bf16.gmra.mxu0 %v589
    %v667 = vpop.f32.mrf.mxu0
    %v668 = vadd.f32 %v608, %v667
    %v669 = vpop.f32.mrf.mxu0
    %v670 = vadd.f32 %v608, %v669
    %671 = vdwg.mxu0
    %v672 = vmax.f32 %v668, 0.0
    %v673 = vmax.f32 %v670, 0.0
    %v674 = vpack.c.bf16 %v673, %v672
    %v675 = vld [vmem:[#allocation14] sm:$0xff]
    %v676 = vld [vmem:[#allocation14 + $0x8] sm:$0xff]
    %v677 = vld [vmem:[#allocation14 + $0x10] sm:$0xff]
    %v678 = vld [vmem:[#allocation14 + $0x18] sm:$0xff]
    %v679 = vld [vmem:[#allocation14 + $0x20] sm:$0xff]
    %v680 = vld [vmem:[#allocation14 + $0x28] sm:$0xff]
    %v681 = vld [vmem:[#allocation14 + $0x30] sm:$0xff]
    %v682 = vld [vmem:[#allocation14 + $0x38] sm:$0xff]
    %v683 = vld [vmem:[#allocation14 + $0x40] sm:$0xff]
    %v684 = vld [vmem:[#allocation14 + $0x48] sm:$0xff]
    %v685 = vld [vmem:[#allocation14 + $0x50] sm:$0xff]
    %v686 = vld [vmem:[#allocation14 + $0x58] sm:$0xff]
    %v687 = vld [vmem:[#allocation14 + $0x60] sm:$0xff]
    %v688 = vld [vmem:[#allocation14 + $0x68] sm:$0xff]
    %v689 = vld [vmem:[#allocation14 + $0x70] sm:$0xff]
    %v690 = vld [vmem:[#allocation14 + $0x78] sm:$0xff]
    %v691 = vld [vmem:[%s12] sm:$0x3]
    %v693 = vperm.slane %v691, 0
    %v694 = vperm.slane %v691, 1
    %v713 = vunpack.c.l.b16 %v675
    %v714 = vunpack.c.h.b16 %v675
    %v715 = vunpack.c.l.b16 %v676
    %v716 = vunpack.c.h.b16 %v676
    %v717 = vunpack.c.l.b16 %v677
    %v718 = vunpack.c.h.b16 %v677
    %v719 = vunpack.c.l.b16 %v678
    %v720 = vunpack.c.h.b16 %v678
    %v721 = vunpack.c.l.b16 %v679
    %v722 = vunpack.c.h.b16 %v679
    %v723 = vunpack.c.l.b16 %v680
    %v724 = vunpack.c.h.b16 %v680
    %v725 = vunpack.c.l.b16 %v681
    %v726 = vunpack.c.h.b16 %v681
    %v727 = vunpack.c.l.b16 %v682
    %v728 = vunpack.c.h.b16 %v682
    %v729 = vunpack.c.l.b16 %v683
    %v730 = vunpack.c.h.b16 %v683
    %v731 = vunpack.c.l.b16 %v684
    %v732 = vunpack.c.h.b16 %v684
    %v733 = vunpack.c.l.b16 %v685
    %v734 = vunpack.c.h.b16 %v685
    %v735 = vunpack.c.l.b16 %v686
    %v736 = vunpack.c.h.b16 %v686
    %v737 = vunpack.c.l.b16 %v687
    %v738 = vunpack.c.h.b16 %v687
    %v739 = vunpack.c.l.b16 %v688
    %v740 = vunpack.c.h.b16 %v688
    %v741 = vunpack.c.l.b16 %v689
    %v742 = vunpack.c.h.b16 %v689
    %v743 = vunpack.c.l.b16 %v690
    %v744 = vunpack.c.h.b16 %v690
    %v745 = vpack.c.b16 %v715, %v713
    %v746 = vpack.c.b16 %v716, %v714
    %v747 = vpack.c.b16 %v719, %v717
    %v748 = vpack.c.b16 %v720, %v718
    %v749 = vpack.c.b16 %v723, %v721
    %v750 = vpack.c.b16 %v724, %v722
    %v751 = vpack.c.b16 %v727, %v725
    %v752 = vpack.c.b16 %v728, %v726
    %v753 = vpack.c.b16 %v731, %v729
    %v754 = vpack.c.b16 %v732, %v730
    %v755 = vpack.c.b16 %v735, %v733
    %v756 = vpack.c.b16 %v736, %v734
    %v757 = vpack.c.b16 %v739, %v737
    %v758 = vpack.c.b16 %v740, %v738
    %v759 = vpack.c.b16 %v743, %v741
    %v760 = vpack.c.b16 %v744, %v742
    %777 = vmatpush.bf16.msra.mxu0 %v759
    %778 = vmatpush.bf16.msra.mxu0 %v757
    %779 = vmatpush.bf16.msra.mxu0 %v755
    %780 = vmatpush.bf16.msra.mxu0 %v753
    %781 = vmatpush.bf16.msra.mxu0 %v751
    %782 = vmatpush.bf16.msra.mxu0 %v749
    %783 = vmatpush.bf16.msra.mxu0 %v747
    %784 = vmatpush.bf16.msra.mxu0 %v745
    %785 = vmatmul.bf16.gmra.mxu0 %v674
    %v786 = vpop.f32.mrf.mxu0
    %v787 = vadd.f32 %v693, %v786
    %v788 = vpop.f32.mrf.mxu0
    %v789 = vadd.f32 %v693, %v788
    %790 = vdwg.mxu0
    %791 = vmatpush.bf16.msra.mxu0 %v760
    %792 = vmatpush.bf16.msra.mxu0 %v758
    %793 = vmatpush.bf16.msra.mxu0 %v756
    %794 = vmatpush.bf16.msra.mxu0 %v754
    %795 = vmatpush.bf16.msra.mxu0 %v752
    %796 = vmatpush.bf16.msra.mxu0 %v750
    %797 = vmatpush.bf16.msra.mxu0 %v748
    %798 = vmatpush.bf16.msra.mxu0 %v746
    %799 = vmatmul.bf16.gmra.mxu0 %v674
    %v800 = vpop.f32.mrf.mxu0
    %v801 = vadd.f32 %v694, %v800
    %v802 = vpop.f32.mrf.mxu0
    %v803 = vadd.f32 %v694, %v802
    %804 = vdwg.mxu0
    %805 = vst [vmem:[#allocation16] sm:$0xff] %v787
    %806 = vst [vmem:[#allocation16 + $0x8] sm:$0xff] %v801
    %807 = vst [vmem:[#allocation16 + $0x10] sm:$0xff] %v789
    %808 = vst [vmem:[#allocation16 + $0x18] sm:$0xff] %v803
    // Predicated region
    $region86: #{tpu_custom_call.1} parent=1 // pred_check
      _
    $region87: #{tpu_custom_call.1} parent=1 // pred_check_branch
      %810 = sbr.rel (0) target = $region89
    $region88: #{tpu_custom_call.1} parent=1 // pred_region
      %812 = vsyncadd [#allocation4], 0
      %s813 = sshll.u32 [#allocation16], 4
      %s814 = int_to_ptr.vmem [resolvable:$true] %s813
      %s815 = sshll.u32 %s13, 4
      %s816 = int_to_ptr.hbm [resolvable:$true] %s815
      %821 = dma.vmem_to_hbm [thread:$0]  %s814, 512, %s816, [#allocation4], 256, 256, 16
    $region89: #{tpu_custom_call.1} parent=1 // pred_fallthru
      _
    // Predicated region
    $region90: #{tpu_custom_call.1} parent=1 // pred_check
      _
    $region91: #{tpu_custom_call.1} parent=1 // pred_check_branch
      %823 = sbr.rel (0) target = $region93
    $region92: #{tpu_custom_call.1} parent=1 // pred_region
      %825 = dma.done [#allocation4], 512
    $region93: #{tpu_custom_call.1} parent=1 // pred_fallthru
      _
    %826 = vsyncpa [#allocation3], 1
    %827 = vsyncpa [#allocation6], 1
    %828 = vsyncpa [#allocation9], 1
    %829 = vsyncpa [#allocation12], 1
    %830 = vsyncpa [#allocation15], 1
    %831 = vsyncpa [#allocation4], 1

</llo_original>
